<compile_context>
chip_gen: v7x
topology: tpu7x:2x2x1
jax: 0.10.0
libtpu: 0.0.40
codegen_flags: <defaults>
</compile_context>

<pallas_src>
from functools import partial

import jax
import jax.numpy as jnp
from jax import lax
from jax.experimental import pallas as pl
from jax.experimental.pallas import tpu as pltpu


# ------------------------------- kernel --------------------------------------

def clstm_kernel(feat_ref, wih0_ref, wblk_ref, bias_ref, out_ref, *, T, H, BB):
    """Fused, skewed 2-layer LSTM over a [T*BB, D] (time-major) block.

    Packed layouts (prepared by prepare_clstm_params):
      wih0_pad : (D, 8H)   layer-0 input weights in layer-0 gate columns,
                           zeros in layer-1 gate columns.
      w_blk    : (2H, 8H)  [[Whh0, Wih1], [0, Whh1]]  (rows: [h0 | h1]).
      bias     : (1, 8H)   b_ih+b_hh of both layers.
      Gate column order: [i0 i1 | f0 f1 | o0 o1 | g0 g1], each block H wide.
    Combined state: h = [h0 | h1], c = [c0 | c1], each (BB, 2H).
    Output: layer-1 hidden state at the last timestep, (BB, H).
    """
    feat = feat_ref[...]                       # (T*BB, D)
    bias = bias_ref[...]                       # (1, 8H)
    w_blk = wblk_ref[...]                      # (2H, 8H), resident across loop

    # Layer-0 input projection for ALL timesteps: one MXU matmul, off the
    # recurrent chain.  Layer-1 columns of wih0_pad are zero, so those columns
    # of `addin` are exactly b1.  At T=8, H=32 this value is 2 vregs — kept in
    # registers, never stored to VMEM scratch.
    addin = jnp.dot(feat, wih0_ref[...],
                    preferred_element_type=jnp.float32) + bias      # (T*BB, 8H)

    def cell(gates, c):
        # One contiguous sigmoid slab (i0 i1 f0 f1 o0 o1) + one tanh slab (g0 g1);
        # elementwise update handles both layers at once on (BB, 2H) slabs.
        sig = jax.nn.sigmoid(gates[:, 0:6 * H])
        g = jnp.tanh(gates[:, 6 * H:8 * H])
        i, f, o = sig[:, 0:2 * H], sig[:, 2 * H:4 * H], sig[:, 4 * H:6 * H]
        c_new = f * c + i * g
        h_new = o * jnp.tanh(c_new)
        return h_new, c_new

    # Mask that keeps the layer-0 half of the combined state (cols [0, H)).
    keep_l0 = (lax.broadcasted_iota(jnp.int32, (1, 2 * H), 1) < H
               ).astype(jnp.float32)

    # --- iteration 0: layer-0 step 0 (h_prev = c_prev = 0 -> no matmul).
    # Layer-1 must keep its zero initial state, so zero its half afterwards.
    h, c = cell(addin[0:BB, :], jnp.zeros((BB, 2 * H), jnp.float32))
    h = h * keep_l0
    c = c * keep_l0

    # --- iterations 1 .. T-1 (fully unrolled; T is a small, static Python int).
    # Skewed schedule: layer-0 advances to step t while layer-1 advances to
    # step t-1; both sets of gate pre-activations come from a single
    # (BB, 2H) @ (2H, 8H) MXU matmul per timestep.
    # TODO(synk): for long sequences, switch to lax.fori_loop(unroll=8) with a
    # VMEM-resident `addin` to bound code size / vreg pressure; on v5e prefer
    # a 128-wide per-step RHS instead of the fused 256-wide block.
    for t in range(1, T):
        gates = addin[t * BB:(t + 1) * BB, :] + jnp.dot(
            h, w_blk, preferred_element_type=jnp.float32)
        h, c = cell(gates, c)

    # --- drain iteration: layer-1 step T-1 (the layer-0 half is discarded).
    gates = bias + jnp.dot(h, w_blk, preferred_element_type=jnp.float32)
    h, _ = cell(gates, c)

    out_ref[...] = h[:, H:2 * H]               # h_n[-1]  -> (BB, H)


# ---------------------------- parameter packing --------------------------------

def prepare_clstm_params(params):
    """PyTorch nn.LSTM layout -> fused kernel layout.  Call ONCE at load time.

    PyTorch: w_ih_l*/w_hh_l* are (4H, in) with row blocks in (i, f, g, o) order.
    Kernel:  columns in [i0 i1 f0 f1 o0 o1 g0 g1] order (gate-major, layer-minor).
    """
    H = params["H"]
    D = params["w_ih_l0"].shape[1]

    def dest(gate, layer):          # destination column offset in the 8H layout
        slot = {"i": 0, "f": 1, "o": 2, "g": 3}[gate]
        return (2 * slot + layer) * H

    def src(gate):                  # source row slice in PyTorch (i, f, g, o) order
        off = {"i": 0, "f": H, "g": 2 * H, "o": 3 * H}[gate]
        return slice(off, off + H)

    wih0_pad = jnp.zeros((D, 8 * H), jnp.float32)
    w_blk = jnp.zeros((2 * H, 8 * H), jnp.float32)
    bias = jnp.zeros((1, 8 * H), jnp.float32)

    b0 = params["b_ih_l0"] + params["b_hh_l0"]
    b1 = params["b_ih_l1"] + params["b_hh_l1"]
    for g in ("i", "f", "o", "g"):
        rs, d0, d1 = src(g), dest(g, 0), dest(g, 1)
        wih0_pad = wih0_pad.at[:, d0:d0 + H].set(params["w_ih_l0"][rs].T)
        w_blk = w_blk.at[0:H, d0:d0 + H].set(params["w_hh_l0"][rs].T)
        w_blk = w_blk.at[0:H, d1:d1 + H].set(params["w_ih_l1"][rs].T)
        w_blk = w_blk.at[H:2 * H, d1:d1 + H].set(params["w_hh_l1"][rs].T)
        bias = bias.at[0, d0:d0 + H].set(b0[rs])
        bias = bias.at[0, d1:d1 + H].set(b1[rs])

    return {"H": H, "D": D, "wih0_pad": wih0_pad, "w_blk": w_blk, "bias": bias}


# ------------------------------- wrapper --------------------------------------

def clstm_forward(features, prepped, *, batch_block=8):
    """features: [T, B, D] -> last_h: [B, H] (top-layer hidden at t = T-1).

    The module spec is B = 1; batching independent sequences (B > 1) fills the
    vreg sublanes / MXU rows for free and is sharded across TensorCores via the
    "parallel" grid axis on v7x.
    """
    T, B, D = features.shape
    H = prepped["H"]
    assert D == prepped["D"]

    bb = min(batch_block, B)
    pad = (-B) % bb
    Bp = B + pad
    if pad:
        features = jnp.concatenate(
            [features, jnp.zeros((T, pad, D), features.dtype)], axis=1)
    nblk = Bp // bb

    # Layout plumbing (plain XLA, off the critical path): one contiguous,
    # time-major (T*bb, D) slab per batch block so the kernel needs no reshapes.
    feat_blocks = (features.reshape(T, nblk, bb, D)
                   .transpose(1, 0, 2, 3)
                   .reshape(nblk, T * bb, D))

    out = pl.pallas_call(
        partial(clstm_kernel, T=T, H=H, BB=bb),
        out_shape=jax.ShapeDtypeStruct((nblk, bb, H), jnp.float32),
        grid=(nblk,),
        in_specs=[
            pl.BlockSpec((None, T * bb, D), lambda i: (i, 0, 0)),
            pl.BlockSpec((D, 8 * H), lambda i: (0, 0)),
            pl.BlockSpec((2 * H, 8 * H), lambda i: (0, 0)),
            pl.BlockSpec((1, 8 * H), lambda i: (0, 0)),
        ],
        out_specs=pl.BlockSpec((None, bb, H), lambda i: (i, 0, 0)),
        compiler_params=pltpu.CompilerParams(
            # Independent sequences -> shard the batch-block axis across TCs (v7x).
            dimension_semantics=("parallel",),
            # NOTE: VMEM footprint here is tiny (<0.2 MiB); at production H set
            # vmem_limit_bytes to the real weight + scratch footprint.
        ),
    )(feat_blocks, prepped["wih0_pad"], prepped["w_blk"], prepped["bias"])

    return out.reshape(Bp, H)[:B]


# ---------------------------- params / reference ------------------------------

def init_params(key, D, H):
    """PyTorch nn.LSTM(input_size=D, hidden_size=H, num_layers=2) layout."""
    keys = jax.random.split(key, 8)
    s = 1.0 / (H ** 0.5)

    def u(k, shape):
        return jax.random.uniform(k, shape, jnp.float32, -s, s)

    return {
        "H": H,
        "w_ih_l0": u(keys[0], (4 * H, D)),
        "w_hh_l0": u(keys[1], (4 * H, H)),
        "b_ih_l0": u(keys[2], (4 * H,)),
        "b_hh_l0": u(keys[3], (4 * H,)),
        "w_ih_l1": u(keys[4], (4 * H, H)),
        "w_hh_l1": u(keys[5], (4 * H, H)),
        "b_ih_l1": u(keys[6], (4 * H,)),
        "b_hh_l1": u(keys[7], (4 * H,)),
    }


def clstm_reference(features, params):
    """Pure-JAX reference matching PyTorch nn.LSTM gate math exactly."""
    H = params["H"]
    feat = features[:, 0, :]

    def run_layer(x_seq, w_ih, w_hh, b_ih, b_hh):
        def cell(carry, x):
            h, c = carry
            gates = x @ w_ih.T + b_ih + h @ w_hh.T + b_hh
            i, f, g, o = jnp.split(gates, 4)
            i, f, o = jax.nn.sigmoid(i), jax.nn.sigmoid(f), jax.nn.sigmoid(o)
            g = jnp.tanh(g)
            c = f * c + i * g
            h = o * jnp.tanh(c)
            return (h, c), h
        (h, _), ys = lax.scan(cell, (jnp.zeros(H), jnp.zeros(H)), x_seq)
        return ys, h

    y0, _ = run_layer(feat, params["w_ih_l0"], params["w_hh_l0"],
                      params["b_ih_l0"], params["b_hh_l0"])
    _, h1 = run_layer(y0, params["w_ih_l1"], params["w_hh_l1"],
                      params["b_ih_l1"], params["b_hh_l1"])
    return h1[None, :]


# --------------------------------- main ----------------------------------------

if __name__ == "__main__":
    T, D, H = 8, 64, 32        # seq_len, input_size, hidden_size (batch = 1 per spec)
    key = jax.random.PRNGKey(0)
    k_feat, k_param = jax.random.split(key)

    features = jax.random.normal(k_feat, (T, 1, D), jnp.float32)   # [T, 1, D]
    params = init_params(k_param, D, H)

    prepped = prepare_clstm_params(params)        # done ONCE, not per call
    last_h = clstm_forward(features, prepped)     # [1, H]
    jax.block_until_ready(last_h)

    assert last_h.shape == (1, H)
    assert bool(jnp.all(jnp.isfinite(last_h)))

    ref = clstm_reference(features, params)
    assert bool(jnp.allclose(last_h, ref, rtol=1e-4, atol=1e-4)), (
        "Pallas cLSTM does not match pure-JAX reference")

    print("KERNEL_OK")
</pallas_src>

<mosaic_0001>
module attributes {stable_mosaic.version = 11 : i64} {
  func.func @clstm_kernel(%arg0: i32, %arg1: memref<1x8x64xf32, #tpu.memory_space<vmem>>, %arg2: memref<64x256xf32, #tpu.memory_space<vmem>>, %arg3: memref<64x256xf32, #tpu.memory_space<vmem>>, %arg4: memref<1x256xf32, #tpu.memory_space<vmem>>, %arg5: memref<1x1x32xf32, #tpu.memory_space<vmem>>) attributes {dimension_semantics = [#tpu.dimension_semantics<parallel>], iteration_bounds = array<i64: 1>, scalar_prefetch = 0 : i64, scratch_operands = 0 : i64, tpu.core_type = #tpu.core_type<tc>, window_params = [{transform_indices = @transform_0, window_bounds = array<i64: 1, 8, 64>}, {pipeline_mode = #tpu.pipeline_mode<synchronous>, transform_indices = @transform_1, window_bounds = array<i64: 64, 256>}, {pipeline_mode = #tpu.pipeline_mode<synchronous>, transform_indices = @transform_2, window_bounds = array<i64: 64, 256>}, {pipeline_mode = #tpu.pipeline_mode<synchronous>, transform_indices = @transform_3, window_bounds = array<i64: 1, 256>}, {transform_indices = @transform_4, window_bounds = array<i64: 1, 1, 32>}]} {
    %c0 = arith.constant 0 : index
    %c0_0 = arith.constant 0 : index
    %c0_1 = arith.constant 0 : index
    %0 = vector.load %arg1[%c0, %c0_0, %c0_1] : memref<1x8x64xf32, #tpu.memory_space<vmem>>, vector<1x8x64xf32>
    %1 = vector.shape_cast %0 : vector<1x8x64xf32> to vector<8x64xf32>
    %c0_2 = arith.constant 0 : index
    %c0_3 = arith.constant 0 : index
    %2 = vector.load %arg4[%c0_2, %c0_3] : memref<1x256xf32, #tpu.memory_space<vmem>>, vector<1x256xf32>
    %c0_4 = arith.constant 0 : index
    %c0_5 = arith.constant 0 : index
    %3 = vector.load %arg3[%c0_4, %c0_5] : memref<64x256xf32, #tpu.memory_space<vmem>>, vector<64x256xf32>
    %c0_6 = arith.constant 0 : index
    %c0_7 = arith.constant 0 : index
    %4 = vector.load %arg2[%c0_6, %c0_7] : memref<64x256xf32, #tpu.memory_space<vmem>>, vector<64x256xf32>
    %cst = arith.constant dense<0.000000e+00> : vector<8x256xf32>
    %5 = tpu.matmul %1, %4, %cst {dimension_numbers = #tpu.dot_dimension_numbers<[1], [0], [0], [1], [0, 0, 1, 1], [], []>} : vector<8x64xf32>, vector<64x256xf32>, vector<8x256xf32> -> vector<8x256xf32>
    %6 = vector.broadcast %2 : vector<1x256xf32> to vector<8x256xf32>
    %7 = arith.addf %5, %6 : vector<8x256xf32>
    %8 = tpu.iota {dimensions = array<i32: 1>} : vector<1x64xi32>
    %c32_i32 = arith.constant 32 : i32
    %9 = vector.broadcast %c32_i32 : i32 to vector<1x64xi32>
    %10 = arith.cmpi slt, %8, %9 : vector<1x64xi32>
    %11 = arith.extui %10 : vector<1x64xi1> to vector<1x64xi32>
    %12 = arith.sitofp %11 : vector<1x64xi32> to vector<1x64xf32>
    %13 = vector.extract_strided_slice %7 {offsets = [0, 0], sizes = [1, 256], strides = [1, 1]} : vector<8x256xf32> to vector<1x256xf32>
    %cst_8 = arith.constant 0.000000e+00 : f32
    %14 = vector.broadcast %cst_8 : f32 to vector<1x64xf32>
    %15 = vector.extract_strided_slice %13 {offsets = [0, 0], sizes = [1, 192], strides = [1, 1]} : vector<1x256xf32> to vector<1x192xf32>
    %16 = arith.negf %15 : vector<1x192xf32>
    %17 = math.exp %16 : vector<1x192xf32>
    %cst_9 = arith.constant 1.000000e+00 : f32
    %18 = vector.broadcast %cst_9 : f32 to vector<1x192xf32>
    %19 = arith.addf %18, %17 : vector<1x192xf32>
    %20 = arith.divf %18, %19 : vector<1x192xf32>
    %21 = vector.extract_strided_slice %13 {offsets = [0, 192], sizes = [1, 64], strides = [1, 1]} : vector<1x256xf32> to vector<1x64xf32>
    %22 = math.tanh %21 : vector<1x64xf32>
    %23 = vector.extract_strided_slice %20 {offsets = [0, 0], sizes = [1, 64], strides = [1, 1]} : vector<1x192xf32> to vector<1x64xf32>
    %24 = vector.extract_strided_slice %20 {offsets = [0, 64], sizes = [1, 64], strides = [1, 1]} : vector<1x192xf32> to vector<1x64xf32>
    %25 = vector.extract_strided_slice %20 {offsets = [0, 128], sizes = [1, 64], strides = [1, 1]} : vector<1x192xf32> to vector<1x64xf32>
    %26 = arith.mulf %24, %14 : vector<1x64xf32>
    %27 = arith.mulf %23, %22 : vector<1x64xf32>
    %28 = arith.addf %26, %27 : vector<1x64xf32>
    %29 = math.tanh %28 : vector<1x64xf32>
    %30 = arith.mulf %25, %29 : vector<1x64xf32>
    %31 = arith.mulf %30, %12 : vector<1x64xf32>
    %32 = arith.mulf %28, %12 : vector<1x64xf32>
    %33 = vector.extract_strided_slice %7 {offsets = [1, 0], sizes = [1, 256], strides = [1, 1]} : vector<8x256xf32> to vector<1x256xf32>
    %cst_10 = arith.constant dense<0.000000e+00> : vector<1x256xf32>
    %34 = tpu.matmul %31, %3, %cst_10 {dimension_numbers = #tpu.dot_dimension_numbers<[1], [0], [0], [1], [0, 0, 1, 1], [], []>} : vector<1x64xf32>, vector<64x256xf32>, vector<1x256xf32> -> vector<1x256xf32>
    %35 = arith.addf %33, %34 : vector<1x256xf32>
    %36 = vector.extract_strided_slice %35 {offsets = [0, 0], sizes = [1, 192], strides = [1, 1]} : vector<1x256xf32> to vector<1x192xf32>
    %37 = arith.negf %36 : vector<1x192xf32>
    %38 = math.exp %37 : vector<1x192xf32>
    %cst_11 = arith.constant 1.000000e+00 : f32
    %39 = vector.broadcast %cst_11 : f32 to vector<1x192xf32>
    %40 = arith.addf %39, %38 : vector<1x192xf32>
    %41 = arith.divf %39, %40 : vector<1x192xf32>
    %42 = vector.extract_strided_slice %35 {offsets = [0, 192], sizes = [1, 64], strides = [1, 1]} : vector<1x256xf32> to vector<1x64xf32>
    %43 = math.tanh %42 : vector<1x64xf32>
    %44 = vector.extract_strided_slice %41 {offsets = [0, 0], sizes = [1, 64], strides = [1, 1]} : vector<1x192xf32> to vector<1x64xf32>
    %45 = vector.extract_strided_slice %41 {offsets = [0, 64], sizes = [1, 64], strides = [1, 1]} : vector<1x192xf32> to vector<1x64xf32>
    %46 = vector.extract_strided_slice %41 {offsets = [0, 128], sizes = [1, 64], strides = [1, 1]} : vector<1x192xf32> to vector<1x64xf32>
    %47 = arith.mulf %45, %32 : vector<1x64xf32>
    %48 = arith.mulf %44, %43 : vector<1x64xf32>
    %49 = arith.addf %47, %48 : vector<1x64xf32>
    %50 = math.tanh %49 : vector<1x64xf32>
    %51 = arith.mulf %46, %50 : vector<1x64xf32>
    %52 = vector.extract_strided_slice %7 {offsets = [2, 0], sizes = [1, 256], strides = [1, 1]} : vector<8x256xf32> to vector<1x256xf32>
    %cst_12 = arith.constant dense<0.000000e+00> : vector<1x256xf32>
    %53 = tpu.matmul %51, %3, %cst_12 {dimension_numbers = #tpu.dot_dimension_numbers<[1], [0], [0], [1], [0, 0, 1, 1], [], []>} : vector<1x64xf32>, vector<64x256xf32>, vector<1x256xf32> -> vector<1x256xf32>
    %54 = arith.addf %52, %53 : vector<1x256xf32>
    %55 = vector.extract_strided_slice %54 {offsets = [0, 0], sizes = [1, 192], strides = [1, 1]} : vector<1x256xf32> to vector<1x192xf32>
    %56 = arith.negf %55 : vector<1x192xf32>
    %57 = math.exp %56 : vector<1x192xf32>
    %cst_13 = arith.constant 1.000000e+00 : f32
    %58 = vector.broadcast %cst_13 : f32 to vector<1x192xf32>
    %59 = arith.addf %58, %57 : vector<1x192xf32>
    %60 = arith.divf %58, %59 : vector<1x192xf32>
    %61 = vector.extract_strided_slice %54 {offsets = [0, 192], sizes = [1, 64], strides = [1, 1]} : vector<1x256xf32> to vector<1x64xf32>
    %62 = math.tanh %61 : vector<1x64xf32>
    %63 = vector.extract_strided_slice %60 {offsets = [0, 0], sizes = [1, 64], strides = [1, 1]} : vector<1x192xf32> to vector<1x64xf32>
    %64 = vector.extract_strided_slice %60 {offsets = [0, 64], sizes = [1, 64], strides = [1, 1]} : vector<1x192xf32> to vector<1x64xf32>
    %65 = vector.extract_strided_slice %60 {offsets = [0, 128], sizes = [1, 64], strides = [1, 1]} : vector<1x192xf32> to vector<1x64xf32>
    %66 = arith.mulf %64, %49 : vector<1x64xf32>
    %67 = arith.mulf %63, %62 : vector<1x64xf32>
    %68 = arith.addf %66, %67 : vector<1x64xf32>
    %69 = math.tanh %68 : vector<1x64xf32>
    %70 = arith.mulf %65, %69 : vector<1x64xf32>
    %71 = vector.extract_strided_slice %7 {offsets = [3, 0], sizes = [1, 256], strides = [1, 1]} : vector<8x256xf32> to vector<1x256xf32>
    %cst_14 = arith.constant dense<0.000000e+00> : vector<1x256xf32>
    %72 = tpu.matmul %70, %3, %cst_14 {dimension_numbers = #tpu.dot_dimension_numbers<[1], [0], [0], [1], [0, 0, 1, 1], [], []>} : vector<1x64xf32>, vector<64x256xf32>, vector<1x256xf32> -> vector<1x256xf32>
    %73 = arith.addf %71, %72 : vector<1x256xf32>
    %74 = vector.extract_strided_slice %73 {offsets = [0, 0], sizes = [1, 192], strides = [1, 1]} : vector<1x256xf32> to vector<1x192xf32>
    %75 = arith.negf %74 : vector<1x192xf32>
    %76 = math.exp %75 : vector<1x192xf32>
    %cst_15 = arith.constant 1.000000e+00 : f32
    %77 = vector.broadcast %cst_15 : f32 to vector<1x192xf32>
    %78 = arith.addf %77, %76 : vector<1x192xf32>
    %79 = arith.divf %77, %78 : vector<1x192xf32>
    %80 = vector.extract_strided_slice %73 {offsets = [0, 192], sizes = [1, 64], strides = [1, 1]} : vector<1x256xf32> to vector<1x64xf32>
    %81 = math.tanh %80 : vector<1x64xf32>
    %82 = vector.extract_strided_slice %79 {offsets = [0, 0], sizes = [1, 64], strides = [1, 1]} : vector<1x192xf32> to vector<1x64xf32>
    %83 = vector.extract_strided_slice %79 {offsets = [0, 64], sizes = [1, 64], strides = [1, 1]} : vector<1x192xf32> to vector<1x64xf32>
    %84 = vector.extract_strided_slice %79 {offsets = [0, 128], sizes = [1, 64], strides = [1, 1]} : vector<1x192xf32> to vector<1x64xf32>
    %85 = arith.mulf %83, %68 : vector<1x64xf32>
    %86 = arith.mulf %82, %81 : vector<1x64xf32>
    %87 = arith.addf %85, %86 : vector<1x64xf32>
    %88 = math.tanh %87 : vector<1x64xf32>
    %89 = arith.mulf %84, %88 : vector<1x64xf32>
    %90 = vector.extract_strided_slice %7 {offsets = [4, 0], sizes = [1, 256], strides = [1, 1]} : vector<8x256xf32> to vector<1x256xf32>
    %cst_16 = arith.constant dense<0.000000e+00> : vector<1x256xf32>
    %91 = tpu.matmul %89, %3, %cst_16 {dimension_numbers = #tpu.dot_dimension_numbers<[1], [0], [0], [1], [0, 0, 1, 1], [], []>} : vector<1x64xf32>, vector<64x256xf32>, vector<1x256xf32> -> vector<1x256xf32>
    %92 = arith.addf %90, %91 : vector<1x256xf32>
    %93 = vector.extract_strided_slice %92 {offsets = [0, 0], sizes = [1, 192], strides = [1, 1]} : vector<1x256xf32> to vector<1x192xf32>
    %94 = arith.negf %93 : vector<1x192xf32>
    %95 = math.exp %94 : vector<1x192xf32>
    %cst_17 = arith.constant 1.000000e+00 : f32
    %96 = vector.broadcast %cst_17 : f32 to vector<1x192xf32>
    %97 = arith.addf %96, %95 : vector<1x192xf32>
    %98 = arith.divf %96, %97 : vector<1x192xf32>
    %99 = vector.extract_strided_slice %92 {offsets = [0, 192], sizes = [1, 64], strides = [1, 1]} : vector<1x256xf32> to vector<1x64xf32>
    %100 = math.tanh %99 : vector<1x64xf32>
    %101 = vector.extract_strided_slice %98 {offsets = [0, 0], sizes = [1, 64], strides = [1, 1]} : vector<1x192xf32> to vector<1x64xf32>
    %102 = vector.extract_strided_slice %98 {offsets = [0, 64], sizes = [1, 64], strides = [1, 1]} : vector<1x192xf32> to vector<1x64xf32>
    %103 = vector.extract_strided_slice %98 {offsets = [0, 128], sizes = [1, 64], strides = [1, 1]} : vector<1x192xf32> to vector<1x64xf32>
    %104 = arith.mulf %102, %87 : vector<1x64xf32>
    %105 = arith.mulf %101, %100 : vector<1x64xf32>
    %106 = arith.addf %104, %105 : vector<1x64xf32>
    %107 = math.tanh %106 : vector<1x64xf32>
    %108 = arith.mulf %103, %107 : vector<1x64xf32>
    %109 = vector.extract_strided_slice %7 {offsets = [5, 0], sizes = [1, 256], strides = [1, 1]} : vector<8x256xf32> to vector<1x256xf32>
    %cst_18 = arith.constant dense<0.000000e+00> : vector<1x256xf32>
    %110 = tpu.matmul %108, %3, %cst_18 {dimension_numbers = #tpu.dot_dimension_numbers<[1], [0], [0], [1], [0, 0, 1, 1], [], []>} : vector<1x64xf32>, vector<64x256xf32>, vector<1x256xf32> -> vector<1x256xf32>
    %111 = arith.addf %109, %110 : vector<1x256xf32>
    %112 = vector.extract_strided_slice %111 {offsets = [0, 0], sizes = [1, 192], strides = [1, 1]} : vector<1x256xf32> to vector<1x192xf32>
    %113 = arith.negf %112 : vector<1x192xf32>
    %114 = math.exp %113 : vector<1x192xf32>
    %cst_19 = arith.constant 1.000000e+00 : f32
    %115 = vector.broadcast %cst_19 : f32 to vector<1x192xf32>
    %116 = arith.addf %115, %114 : vector<1x192xf32>
    %117 = arith.divf %115, %116 : vector<1x192xf32>
    %118 = vector.extract_strided_slice %111 {offsets = [0, 192], sizes = [1, 64], strides = [1, 1]} : vector<1x256xf32> to vector<1x64xf32>
    %119 = math.tanh %118 : vector<1x64xf32>
    %120 = vector.extract_strided_slice %117 {offsets = [0, 0], sizes = [1, 64], strides = [1, 1]} : vector<1x192xf32> to vector<1x64xf32>
    %121 = vector.extract_strided_slice %117 {offsets = [0, 64], sizes = [1, 64], strides = [1, 1]} : vector<1x192xf32> to vector<1x64xf32>
    %122 = vector.extract_strided_slice %117 {offsets = [0, 128], sizes = [1, 64], strides = [1, 1]} : vector<1x192xf32> to vector<1x64xf32>
    %123 = arith.mulf %121, %106 : vector<1x64xf32>
    %124 = arith.mulf %120, %119 : vector<1x64xf32>
    %125 = arith.addf %123, %124 : vector<1x64xf32>
    %126 = math.tanh %125 : vector<1x64xf32>
    %127 = arith.mulf %122, %126 : vector<1x64xf32>
    %128 = vector.extract_strided_slice %7 {offsets = [6, 0], sizes = [1, 256], strides = [1, 1]} : vector<8x256xf32> to vector<1x256xf32>
    %cst_20 = arith.constant dense<0.000000e+00> : vector<1x256xf32>
    %129 = tpu.matmul %127, %3, %cst_20 {dimension_numbers = #tpu.dot_dimension_numbers<[1], [0], [0], [1], [0, 0, 1, 1], [], []>} : vector<1x64xf32>, vector<64x256xf32>, vector<1x256xf32> -> vector<1x256xf32>
    %130 = arith.addf %128, %129 : vector<1x256xf32>
    %131 = vector.extract_strided_slice %130 {offsets = [0, 0], sizes = [1, 192], strides = [1, 1]} : vector<1x256xf32> to vector<1x192xf32>
    %132 = arith.negf %131 : vector<1x192xf32>
    %133 = math.exp %132 : vector<1x192xf32>
    %cst_21 = arith.constant 1.000000e+00 : f32
    %134 = vector.broadcast %cst_21 : f32 to vector<1x192xf32>
    %135 = arith.addf %134, %133 : vector<1x192xf32>
    %136 = arith.divf %134, %135 : vector<1x192xf32>
    %137 = vector.extract_strided_slice %130 {offsets = [0, 192], sizes = [1, 64], strides = [1, 1]} : vector<1x256xf32> to vector<1x64xf32>
    %138 = math.tanh %137 : vector<1x64xf32>
    %139 = vector.extract_strided_slice %136 {offsets = [0, 0], sizes = [1, 64], strides = [1, 1]} : vector<1x192xf32> to vector<1x64xf32>
    %140 = vector.extract_strided_slice %136 {offsets = [0, 64], sizes = [1, 64], strides = [1, 1]} : vector<1x192xf32> to vector<1x64xf32>
    %141 = vector.extract_strided_slice %136 {offsets = [0, 128], sizes = [1, 64], strides = [1, 1]} : vector<1x192xf32> to vector<1x64xf32>
    %142 = arith.mulf %140, %125 : vector<1x64xf32>
    %143 = arith.mulf %139, %138 : vector<1x64xf32>
    %144 = arith.addf %142, %143 : vector<1x64xf32>
    %145 = math.tanh %144 : vector<1x64xf32>
    %146 = arith.mulf %141, %145 : vector<1x64xf32>
    %147 = vector.extract_strided_slice %7 {offsets = [7, 0], sizes = [1, 256], strides = [1, 1]} : vector<8x256xf32> to vector<1x256xf32>
    %cst_22 = arith.constant dense<0.000000e+00> : vector<1x256xf32>
    %148 = tpu.matmul %146, %3, %cst_22 {dimension_numbers = #tpu.dot_dimension_numbers<[1], [0], [0], [1], [0, 0, 1, 1], [], []>} : vector<1x64xf32>, vector<64x256xf32>, vector<1x256xf32> -> vector<1x256xf32>
    %149 = arith.addf %147, %148 : vector<1x256xf32>
    %150 = vector.extract_strided_slice %149 {offsets = [0, 0], sizes = [1, 192], strides = [1, 1]} : vector<1x256xf32> to vector<1x192xf32>
    %151 = arith.negf %150 : vector<1x192xf32>
    %152 = math.exp %151 : vector<1x192xf32>
    %cst_23 = arith.constant 1.000000e+00 : f32
    %153 = vector.broadcast %cst_23 : f32 to vector<1x192xf32>
    %154 = arith.addf %153, %152 : vector<1x192xf32>
    %155 = arith.divf %153, %154 : vector<1x192xf32>
    %156 = vector.extract_strided_slice %149 {offsets = [0, 192], sizes = [1, 64], strides = [1, 1]} : vector<1x256xf32> to vector<1x64xf32>
    %157 = math.tanh %156 : vector<1x64xf32>
    %158 = vector.extract_strided_slice %155 {offsets = [0, 0], sizes = [1, 64], strides = [1, 1]} : vector<1x192xf32> to vector<1x64xf32>
    %159 = vector.extract_strided_slice %155 {offsets = [0, 64], sizes = [1, 64], strides = [1, 1]} : vector<1x192xf32> to vector<1x64xf32>
    %160 = vector.extract_strided_slice %155 {offsets = [0, 128], sizes = [1, 64], strides = [1, 1]} : vector<1x192xf32> to vector<1x64xf32>
    %161 = arith.mulf %159, %144 : vector<1x64xf32>
    %162 = arith.mulf %158, %157 : vector<1x64xf32>
    %163 = arith.addf %161, %162 : vector<1x64xf32>
    %164 = math.tanh %163 : vector<1x64xf32>
    %165 = arith.mulf %160, %164 : vector<1x64xf32>
    %cst_24 = arith.constant dense<0.000000e+00> : vector<1x256xf32>
    %166 = tpu.matmul %165, %3, %cst_24 {dimension_numbers = #tpu.dot_dimension_numbers<[1], [0], [0], [1], [0, 0, 1, 1], [], []>} : vector<1x64xf32>, vector<64x256xf32>, vector<1x256xf32> -> vector<1x256xf32>
    %167 = arith.addf %2, %166 : vector<1x256xf32>
    %168 = vector.extract_strided_slice %167 {offsets = [0, 0], sizes = [1, 192], strides = [1, 1]} : vector<1x256xf32> to vector<1x192xf32>
    %169 = arith.negf %168 : vector<1x192xf32>
    %170 = math.exp %169 : vector<1x192xf32>
    %cst_25 = arith.constant 1.000000e+00 : f32
    %171 = vector.broadcast %cst_25 : f32 to vector<1x192xf32>
    %172 = arith.addf %171, %170 : vector<1x192xf32>
    %173 = arith.divf %171, %172 : vector<1x192xf32>
    %174 = vector.extract_strided_slice %167 {offsets = [0, 192], sizes = [1, 64], strides = [1, 1]} : vector<1x256xf32> to vector<1x64xf32>
    %175 = math.tanh %174 : vector<1x64xf32>
    %176 = vector.extract_strided_slice %173 {offsets = [0, 0], sizes = [1, 64], strides = [1, 1]} : vector<1x192xf32> to vector<1x64xf32>
    %177 = vector.extract_strided_slice %173 {offsets = [0, 64], sizes = [1, 64], strides = [1, 1]} : vector<1x192xf32> to vector<1x64xf32>
    %178 = vector.extract_strided_slice %173 {offsets = [0, 128], sizes = [1, 64], strides = [1, 1]} : vector<1x192xf32> to vector<1x64xf32>
    %179 = arith.mulf %177, %163 : vector<1x64xf32>
    %180 = arith.mulf %176, %175 : vector<1x64xf32>
    %181 = arith.addf %179, %180 : vector<1x64xf32>
    %182 = math.tanh %181 : vector<1x64xf32>
    %183 = arith.mulf %178, %182 : vector<1x64xf32>
    %184 = vector.extract_strided_slice %183 {offsets = [0, 32], sizes = [1, 32], strides = [1, 1]} : vector<1x64xf32> to vector<1x32xf32>
    %c0_26 = arith.constant 0 : index
    %c0_27 = arith.constant 0 : index
    %c0_28 = arith.constant 0 : index
    %185 = vector.load %arg5[%c0_26, %c0_27, %c0_28] : memref<1x1x32xf32, #tpu.memory_space<vmem>>, vector<1x1x32xf32>
    %186 = vector.shape_cast %185 : vector<1x1x32xf32> to vector<1x32xf32>
    %187 = vector.shape_cast %184 : vector<1x32xf32> to vector<1x1x32xf32>
    tpu.vector_store %arg5[%c0_26, %c0_27, %c0_28], %187 {strides = array<i32>} : memref<1x1x32xf32, #tpu.memory_space<vmem>>, vector<1x1x32xf32>,
    return
  }
  func.func @transform_0(%arg0: i32) -> (i32, i32, i32) {
    %c0_i32 = arith.constant 0 : i32
    %c0_i32_0 = arith.constant 0 : i32
    %c0_i32_1 = arith.constant 0 : i32
    return %arg0, %c0_i32, %c0_i32_0 : i32, i32, i32
  }
  func.func @transform_1(%arg0: i32) -> (i32, i32) {
    %c0_i32 = arith.constant 0 : i32
    %c0_i32_0 = arith.constant 0 : i32
    %c0_i32_1 = arith.constant 0 : i32
    return %c0_i32, %c0_i32_0 : i32, i32
  }
  func.func @transform_2(%arg0: i32) -> (i32, i32) {
    %c0_i32 = arith.constant 0 : i32
    %c0_i32_0 = arith.constant 0 : i32
    %c0_i32_1 = arith.constant 0 : i32
    return %c0_i32, %c0_i32_0 : i32, i32
  }
  func.func @transform_3(%arg0: i32) -> (i32, i32) {
    %c0_i32 = arith.constant 0 : i32
    %c0_i32_0 = arith.constant 0 : i32
    %c0_i32_1 = arith.constant 0 : i32
    return %c0_i32, %c0_i32_0 : i32, i32
  }
  func.func @transform_4(%arg0: i32) -> (i32, i32, i32) {
    %c0_i32 = arith.constant 0 : i32
    %c0_i32_0 = arith.constant 0 : i32
    %c0_i32_1 = arith.constant 0 : i32
    return %arg0, %c0_i32, %c0_i32_0 : i32, i32, i32
  }
}

</mosaic_0001>

<llo_original>
// kernel: tpu_custom_call.1
$region0: #{tpu_custom_call.1}
  #allocation0 [shape = 'u32[]', space=smem, size = 0x4, offset = 0x4, fixed_abs, tag = 'smem constant byte address 0x4 - core index']
  #allocation1 [shape = 'u32[144,128]{1,0:T(1,128)}', space=vmem, size = 0x12000, scoped, tag = 'internal scratch']
  %s0 = inlined_call_operand.hbm [shape: f32[1,8,64], index: 0, kind: input, shape index: {}]
  %s1 = inlined_call_operand.hbm [shape: f32[64,256], index: 1, kind: input, shape index: {}]
  %s2 = inlined_call_operand.hbm [shape: f32[64,256], index: 2, kind: input, shape index: {}]
  %s3 = inlined_call_operand.vmem [shape: f32[1,256], index: 3, kind: input, shape index: {}]
  %s4 = inlined_call_operand.hbm [shape: f32[1,1,32], index: 4, kind: output, shape index: {}]
  %s5 = sld [smem:[#allocation0]]
  $region38: #{tpu_custom_call.1} parent=0
    _
  %s7 = ssub.s32 1, %s5
  %s8 = scalar_select 0, %s7, %s5
  $region1: #{tpu_custom_call.1} parent=0
    #allocation2 [shape = 'u8[4096]{0}', space=vmem, size = 0x1000, scoped, tag = 'input window, operand 0, single buffered']
    #allocation3 [shape = 's32[1]{0}', space=sflag, size = 0x4, scoped, tag = 'scoped memory for tpu_custom_call.1']
    #allocation4 [shape = 's32[1]{0}', space=sflag, size = 0x4, scoped, tag = 'scoped memory for tpu_custom_call.1']
    #allocation5 [shape = 'u8[65536]{0}', space=vmem, size = 0x10000, scoped, tag = 'input window, operand 1, single buffered']
    #allocation6 [shape = 's32[1]{0}', space=sflag, size = 0x4, scoped, tag = 'scoped memory for tpu_custom_call.1']
    #allocation7 [shape = 'u8[65536]{0}', space=vmem, size = 0x10000, scoped, tag = 'input window, operand 2, single buffered']
    #allocation8 [shape = 'u8[512]{0}', space=vmem, size = 0x400, scoped, tag = 'output window, operand 0, single buffered']
    %9 = vsyncpa [#allocation3], 0
    %10 = vsyncpa [#allocation6], 0
    %11 = vsyncpa [#allocation4], 0
    // Predicated region
    $region2: #{tpu_custom_call.1} parent=1 // pred_check
      _
    $region3: #{tpu_custom_call.1} parent=1 // pred_check_branch
      %13 = sbr.rel (0) target = $region5
    $region4: #{tpu_custom_call.1} parent=1 // pred_region
      %s15 = ssub.s32 128, 128
      %16 = vsyncadd [#allocation3], %s15
      %s18 = sshll.u32 [#allocation2], 4
      %s19 = int_to_ptr.vmem [resolvable:$true] %s18
      %21 = dma.hbm_to_vmem [thread:$0]  %s0, 128, %s19, [#allocation3]
    $region5: #{tpu_custom_call.1} parent=1 // pred_fallthru
      _
    // Predicated region
    $region6: #{tpu_custom_call.1} parent=1 // pred_check
      _
    $region7: #{tpu_custom_call.1} parent=1 // pred_check_branch
      %23 = sbr.rel (0) target = $region9
    $region8: #{tpu_custom_call.1} parent=1 // pred_region
      %s25 = ssub.s32 2048, 2048
      %26 = vsyncadd [#allocation6], %s25
      %s27 = sshll.u32 [#allocation5], 4
      %s28 = int_to_ptr.vmem [resolvable:$true] %s27
      %33 = dma.hbm_to_vmem [thread:$0]  %s1, 2048, %s28, [#allocation6], 256, 256, 16
    $region9: #{tpu_custom_call.1} parent=1 // pred_fallthru
      _
    // Predicated region
    $region10: #{tpu_custom_call.1} parent=1 // pred_check
      _
    $region11: #{tpu_custom_call.1} parent=1 // pred_check_branch
      %35 = sbr.rel (0) target = $region13
    $region12: #{tpu_custom_call.1} parent=1 // pred_region
      %s37 = ssub.s32 2048, 2048
      %38 = vsyncadd [#allocation6], %s37
      %s39 = sshll.u32 [#allocation7], 4
      %s40 = int_to_ptr.vmem [resolvable:$true] %s39
      %45 = dma.hbm_to_vmem [thread:$0]  %s2, 2048, %s40, [#allocation6], 256, 256, 16
    $region13: #{tpu_custom_call.1} parent=1 // pred_fallthru
      _
    // Predicated region
    $region14: #{tpu_custom_call.1} parent=1 // pred_check
      _
    $region15: #{tpu_custom_call.1} parent=1 // pred_check_branch
      %47 = sbr.rel (0) target = $region17
    $region16: #{tpu_custom_call.1} parent=1 // pred_region
      _
    $region17: #{tpu_custom_call.1} parent=1 // pred_fallthru
      _
    // Predicated region
    $region18: #{tpu_custom_call.1} parent=1 // pred_check
      _
    $region19: #{tpu_custom_call.1} parent=1 // pred_check_branch
      %49 = sbr.rel (0) target = $region21
    $region20: #{tpu_custom_call.1} parent=1 // pred_region
      %50 = dma.done [#allocation3], 128
    $region21: #{tpu_custom_call.1} parent=1 // pred_fallthru
      _
    // Predicated region
    $region22: #{tpu_custom_call.1} parent=1 // pred_check
      _
    $region23: #{tpu_custom_call.1} parent=1 // pred_check_branch
      %52 = sbr.rel (0) target = $region25
    $region24: #{tpu_custom_call.1} parent=1 // pred_region
      %53 = dma.done [#allocation6], 2048
    $region25: #{tpu_custom_call.1} parent=1 // pred_fallthru
      _
    // Predicated region
    $region26: #{tpu_custom_call.1} parent=1 // pred_check
      _
    $region27: #{tpu_custom_call.1} parent=1 // pred_check_branch
      %55 = sbr.rel (0) target = $region29
    $region28: #{tpu_custom_call.1} parent=1 // pred_region
      %56 = dma.done [#allocation6], 2048
    $region29: #{tpu_custom_call.1} parent=1 // pred_fallthru
      _
    %v57 = vld [vmem:[#allocation2] sm:$0xff]
    %v58 = vld [vmem:[%s3] sm:$0x3]
    %v59 = vld [vmem:[#allocation7] sm:$0xff]
    %v60 = vld [vmem:[#allocation7 + $0x8] sm:$0xff]
    %v61 = vld [vmem:[#allocation7 + $0x10] sm:$0xff]
    %v62 = vld [vmem:[#allocation7 + $0x18] sm:$0xff]
    %v63 = vld [vmem:[#allocation7 + $0x20] sm:$0xff]
    %v64 = vld [vmem:[#allocation7 + $0x28] sm:$0xff]
    %v65 = vld [vmem:[#allocation7 + $0x30] sm:$0xff]
    %v66 = vld [vmem:[#allocation7 + $0x38] sm:$0xff]
    %v67 = vld [vmem:[#allocation7 + $0x40] sm:$0xff]
    %v68 = vld [vmem:[#allocation7 + $0x48] sm:$0xff]
    %v69 = vld [vmem:[#allocation7 + $0x50] sm:$0xff]
    %v70 = vld [vmem:[#allocation7 + $0x58] sm:$0xff]
    %v71 = vld [vmem:[#allocation7 + $0x60] sm:$0xff]
    %v72 = vld [vmem:[#allocation7 + $0x68] sm:$0xff]
    %v73 = vld [vmem:[#allocation7 + $0x70] sm:$0xff]
    %v74 = vld [vmem:[#allocation7 + $0x78] sm:$0xff]
    %v75 = vld [vmem:[#allocation5] sm:$0xff]
    %v76 = vld [vmem:[#allocation5 + $0x8] sm:$0xff]
    %v77 = vld [vmem:[#allocation5 + $0x10] sm:$0xff]
    %v78 = vld [vmem:[#allocation5 + $0x18] sm:$0xff]
    %v79 = vld [vmem:[#allocation5 + $0x20] sm:$0xff]
    %v80 = vld [vmem:[#allocation5 + $0x28] sm:$0xff]
    %v81 = vld [vmem:[#allocation5 + $0x30] sm:$0xff]
    %v82 = vld [vmem:[#allocation5 + $0x38] sm:$0xff]
    %v83 = vld [vmem:[#allocation5 + $0x40] sm:$0xff]
    %v84 = vld [vmem:[#allocation5 + $0x48] sm:$0xff]
    %v85 = vld [vmem:[#allocation5 + $0x50] sm:$0xff]
    %v86 = vld [vmem:[#allocation5 + $0x58] sm:$0xff]
    %v87 = vld [vmem:[#allocation5 + $0x60] sm:$0xff]
    %v88 = vld [vmem:[#allocation5 + $0x68] sm:$0xff]
    %v89 = vld [vmem:[#allocation5 + $0x70] sm:$0xff]
    %v90 = vld [vmem:[#allocation5 + $0x78] sm:$0xff]
    %v92 = vlaneseq
    %v93 = vshrl.u32 %v92, 7
    %v94 = vsub.s32 0, %v93
    %v95 = vrot.slane %v58, %v94
    %v96 = vlaneseq
    %v97 = vshrl.u32 %v96, 7
    %v98 = vsub.s32 1, %v97
    %v99 = vrot.slane %v58, %v98
    %vm102 = vcmask 523264
    %v104 = vsel %vm102, %v57, 0
    %106 = vmatprep.subr.mxu0 %v76
    %107 = vmatpush1.msra.mxu0 %v75
    %108 = vmatprep.subr.mxu0 %v78
    %109 = vmatpush1.msra.mxu0 %v77
    %110 = vmatprep.subr.mxu0 %v80
    %111 = vmatpush1.msra.mxu0 %v79
    %112 = vmatprep.subr.mxu0 %v82
    %113 = vmatpush1.msra.mxu0 %v81
    %114 = vmatprep.subr.mxu0 %v84
    %115 = vmatpush1.msra.mxu0 %v83
    %116 = vmatprep.subr.mxu0 %v86
    %117 = vmatpush1.msra.mxu0 %v85
    %118 = vmatprep.subr.mxu0 %v88
    %119 = vmatpush1.msra.mxu0 %v87
    %120 = vmatprep.subr.mxu0 %v90
    %121 = vmatpush1.msra.mxu0 %v89
    %122 = vmatprep.subr.mxu0 0.0
    %123 = vmatpush1.msra.mxu0 0.0
    %124 = vmatprep.subr.mxu0 0.0
    %125 = vmatpush1.msra.mxu0 0.0
    %126 = vmatprep.subr.mxu0 0.0
    %127 = vmatpush1.msra.mxu0 0.0
    %128 = vmatprep.subr.mxu0 0.0
    %129 = vmatpush1.msra.mxu0 0.0
    %130 = vmatprep.subr.mxu0 0.0
    %131 = vmatpush1.msra.mxu0 0.0
    %132 = vmatprep.subr.mxu0 0.0
    %133 = vmatpush1.msra.mxu0 0.0
    %134 = vmatprep.subr.mxu0 0.0
    %135 = vmatpush1.msra.mxu0 0.0
    %136 = vmatprep.subr.mxu0 0.0
    %137 = vmatpush1.msra.mxu0 0.0
    %138 = vmatprep.subr.mxu0 0.0
    %139 = vmatpush1.msra.mxu0 0.0
    %140 = vmatprep.subr.mxu0 0.0
    %141 = vmatpush1.msra.mxu0 0.0
    %142 = vmatprep.subr.mxu0 0.0
    %143 = vmatpush1.msra.mxu0 0.0
    %144 = vmatprep.subr.mxu0 0.0
    %145 = vmatpush1.msra.mxu0 0.0
    %146 = vmatprep.subr.mxu0 0.0
    %147 = vmatpush1.msra.mxu0 0.0
    %148 = vmatprep.subr.mxu0 0.0
    %149 = vmatpush1.msra.mxu0 0.0
    %150 = vmatprep.subr.mxu0 0.0
    %151 = vmatpush1.msra.mxu0 0.0
    %152 = vmatprep.subr.mxu0 0.0
    %153 = vmatpush1.msra.mxu0 0.0
    %154 = vmatprep.subr.mxu0 0.0
    %155 = vmatpush1.msra.mxu0 0.0
    %156 = vmatprep.subr.mxu0 0.0
    %157 = vmatpush1.msra.mxu0 0.0
    %158 = vmatprep.subr.mxu0 0.0
    %159 = vmatpush1.msra.mxu0 0.0
    %160 = vmatprep.subr.mxu0 0.0
    %161 = vmatpush1.msra.mxu0 0.0
    %162 = vmatprep.subr.mxu0 0.0
    %163 = vmatpush1.msra.mxu0 0.0
    %164 = vmatprep.subr.mxu0 0.0
    %165 = vmatpush1.msra.mxu0 0.0
    %166 = vmatprep.subr.mxu0 0.0
    %167 = vmatpush1.msra.mxu0 0.0
    %168 = vmatprep.subr.mxu0 0.0
    %169 = vmatpush1.msra.mxu0 0.0
    %170 = vmatprep.mubr.f32.mxu0 0.0
    %171 = vmatmul.mubr.f32.gmra.mrb[0].mxu0 %v104
    %v172 = vpop.f32.mrb[0].mxu0
    %v173 = vadd.f32 %v95, %v172
    %v174 = vpop.f32.mrb[0].mxu0
    %v175 = vadd.f32 %v99, %v174
    %176 = vdwg.mxu0
    %v177 = vlaneseq
    %v178 = vand.u32 %v177, 127
    %vm179 = vcmp.lt.s32.totalorder %v178, 32
    %v180 = vsel %vm179, 1, 0
    %v181 = vcvt.s32.f32 %v180
    %v182 = vxor.u32 %v173, 2147483648
    %v183 = vxor.u32 %v175, 2147483648
    %v184 = vmul.f32 %v182, 1.442695
    %v185 = vpow.pop %v184
    %v186 = vmul.f32 %v183, 1.442695
    %v187 = vpow.pop %v186
    %v188 = vadd.f32 %v185, 1.0
    %v189 = vadd.f32 %v187, 1.0
    %v190 = vrcp.pop %v188
    %v191 = vmul.f32 1.0, %v190
    %v192 = vrcp.pop %v189
    %v193 = vmul.f32 1.0, %v192
    %v194 = vtanh.pop %v175
    %v195 = vmul.f32 %v191, 0.0
    %197 = vrot.lane.b32.xlu0 %v194, 64
    %v198 = vpop.permute.xlu0 %197
    %v200 = vmul.f32 %v191, %v198
    %202 = vrot.lane.b32.xlu0 %v200, 64
    %v203 = vpop.permute.xlu0 %202
    %v205 = vadd.f32 %v195, %v203
    %v206 = vtanh.pop %v205
    %208 = vrot.lane.b32.xlu0 %v206, 64
    %v209 = vpop.permute.xlu0 %208
    %v211 = vmul.f32 %v193, %v209
    %v212 = vmul.f32 %v211, %v181
    %214 = vrot.lane.b32.xlu0 %v181, 64
    %v215 = vpop.permute.xlu0 %214
    %v217 = vmul.f32 %v205, %v215
    %v219 = vsel %vm102, %v212, 0
    %221 = vmatprep.subr.mxu0 %v60
    %222 = vmatpush1.msra.mxu0 %v59
    %223 = vmatprep.subr.mxu0 %v62
    %224 = vmatpush1.msra.mxu0 %v61
    %225 = vmatprep.subr.mxu0 %v64
    %226 = vmatpush1.msra.mxu0 %v63
    %227 = vmatprep.subr.mxu0 %v66
    %228 = vmatpush1.msra.mxu0 %v65
    %229 = vmatprep.subr.mxu0 %v68
    %230 = vmatpush1.msra.mxu0 %v67
    %231 = vmatprep.subr.mxu0 %v70
    %232 = vmatpush1.msra.mxu0 %v69
    %233 = vmatprep.subr.mxu0 %v72
    %234 = vmatpush1.msra.mxu0 %v71
    %235 = vmatprep.subr.mxu0 %v74
    %236 = vmatpush1.msra.mxu0 %v73
    %237 = vmatprep.subr.mxu0 0.0
    %238 = vmatpush1.msra.mxu0 0.0
    %239 = vmatprep.subr.mxu0 0.0
    %240 = vmatpush1.msra.mxu0 0.0
    %241 = vmatprep.subr.mxu0 0.0
    %242 = vmatpush1.msra.mxu0 0.0
    %243 = vmatprep.subr.mxu0 0.0
    %244 = vmatpush1.msra.mxu0 0.0
    %245 = vmatprep.subr.mxu0 0.0
    %246 = vmatpush1.msra.mxu0 0.0
    %247 = vmatprep.subr.mxu0 0.0
    %248 = vmatpush1.msra.mxu0 0.0
    %249 = vmatprep.subr.mxu0 0.0
    %250 = vmatpush1.msra.mxu0 0.0
    %251 = vmatprep.subr.mxu0 0.0
    %252 = vmatpush1.msra.mxu0 0.0
    %253 = vmatprep.subr.mxu0 0.0
    %254 = vmatpush1.msra.mxu0 0.0
    %255 = vmatprep.subr.mxu0 0.0
    %256 = vmatpush1.msra.mxu0 0.0
    %257 = vmatprep.subr.mxu0 0.0
    %258 = vmatpush1.msra.mxu0 0.0
    %259 = vmatprep.subr.mxu0 0.0
    %260 = vmatpush1.msra.mxu0 0.0
    %261 = vmatprep.subr.mxu0 0.0
    %262 = vmatpush1.msra.mxu0 0.0
    %263 = vmatprep.subr.mxu0 0.0
    %264 = vmatpush1.msra.mxu0 0.0
    %265 = vmatprep.subr.mxu0 0.0
    %266 = vmatpush1.msra.mxu0 0.0
    %267 = vmatprep.subr.mxu0 0.0
    %268 = vmatpush1.msra.mxu0 0.0
    %269 = vmatprep.subr.mxu0 0.0
    %270 = vmatpush1.msra.mxu0 0.0
    %271 = vmatprep.subr.mxu0 0.0
    %272 = vmatpush1.msra.mxu0 0.0
    %273 = vmatprep.subr.mxu0 0.0
    %274 = vmatpush1.msra.mxu0 0.0
    %275 = vmatprep.subr.mxu0 0.0
    %276 = vmatpush1.msra.mxu0 0.0
    %277 = vmatprep.subr.mxu0 0.0
    %278 = vmatpush1.msra.mxu0 0.0
    %279 = vmatprep.subr.mxu0 0.0
    %280 = vmatpush1.msra.mxu0 0.0
    %281 = vmatprep.subr.mxu0 0.0
    %282 = vmatpush1.msra.mxu0 0.0
    %283 = vmatprep.subr.mxu0 0.0
    %284 = vmatpush1.msra.mxu0 0.0
    %285 = vmatprep.mubr.f32.mxu0 0.0
    %286 = vmatmul.mubr.f32.gmra.mrb[0].mxu0 %v219
    %v287 = vpop.f32.mrb[0].mxu0
    %v288 = vadd.f32 0.0, %v287
    %v289 = vpop.f32.mrb[0].mxu0
    %v290 = vadd.f32 0.0, %v289
    %291 = vdwg.mxu0
    %v294 = vrot.slane %v288, 7
    %v295 = vrot.slane %v290, 7
    %v298 = vadd.f32 %v173, %v294
    %v299 = vadd.f32 %v175, %v295
    %v300 = vxor.u32 %v298, 2147483648
    %v301 = vxor.u32 %v299, 2147483648
    %v302 = vmul.f32 %v300, 1.442695
    %v303 = vpow.pop %v302
    %v304 = vmul.f32 %v301, 1.442695
    %v305 = vpow.pop %v304
    %v306 = vadd.f32 %v303, 1.0
    %v307 = vadd.f32 %v305, 1.0
    %v308 = vrcp.pop %v306
    %v309 = vmul.f32 1.0, %v308
    %v310 = vrcp.pop %v307
    %v311 = vmul.f32 1.0, %v310
    %v312 = vtanh.pop %v299
    %v314 = vrot.slane %v217, 7
    %v316 = vmul.f32 %v309, %v314
    %318 = vrot.lane.b32.xlu0 %v312, 64
    %v319 = vpop.permute.xlu0 %318
    %v321 = vmul.f32 %v309, %v319
    %323 = vrot.lane.b32.xlu0 %v321, 64
    %v324 = vpop.permute.xlu0 %323
    %v326 = vadd.f32 %v316, %v324
    %v327 = vtanh.pop %v326
    %329 = vrot.lane.b32.xlu0 %v327, 64
    %v330 = vpop.permute.xlu0 %329
    %v332 = vmul.f32 %v311, %v330
    %v334 = vrot.slane %v332, 1
    %v335 = vsel %vm102, %v334, 0
    %337 = vmatprep.subr.mxu0 %v60
    %338 = vmatpush1.msra.mxu0 %v59
    %339 = vmatprep.subr.mxu0 %v62
    %340 = vmatpush1.msra.mxu0 %v61
    %341 = vmatprep.subr.mxu0 %v64
    %342 = vmatpush1.msra.mxu0 %v63
    %343 = vmatprep.subr.mxu0 %v66
    %344 = vmatpush1.msra.mxu0 %v65
    %345 = vmatprep.subr.mxu0 %v68
    %346 = vmatpush1.msra.mxu0 %v67
    %347 = vmatprep.subr.mxu0 %v70
    %348 = vmatpush1.msra.mxu0 %v69
    %349 = vmatprep.subr.mxu0 %v72
    %350 = vmatpush1.msra.mxu0 %v71
    %351 = vmatprep.subr.mxu0 %v74
    %352 = vmatpush1.msra.mxu0 %v73
    %353 = vmatprep.subr.mxu0 0.0
    %354 = vmatpush1.msra.mxu0 0.0
    %355 = vmatprep.subr.mxu0 0.0
    %356 = vmatpush1.msra.mxu0 0.0
    %357 = vmatprep.subr.mxu0 0.0
    %358 = vmatpush1.msra.mxu0 0.0
    %359 = vmatprep.subr.mxu0 0.0
    %360 = vmatpush1.msra.mxu0 0.0
    %361 = vmatprep.subr.mxu0 0.0
    %362 = vmatpush1.msra.mxu0 0.0
    %363 = vmatprep.subr.mxu0 0.0
    %364 = vmatpush1.msra.mxu0 0.0
    %365 = vmatprep.subr.mxu0 0.0
    %366 = vmatpush1.msra.mxu0 0.0
    %367 = vmatprep.subr.mxu0 0.0
    %368 = vmatpush1.msra.mxu0 0.0
    %369 = vmatprep.subr.mxu0 0.0
    %370 = vmatpush1.msra.mxu0 0.0
    %371 = vmatprep.subr.mxu0 0.0
    %372 = vmatpush1.msra.mxu0 0.0
    %373 = vmatprep.subr.mxu0 0.0
    %374 = vmatpush1.msra.mxu0 0.0
    %375 = vmatprep.subr.mxu0 0.0
    %376 = vmatpush1.msra.mxu0 0.0
    %377 = vmatprep.subr.mxu0 0.0
    %378 = vmatpush1.msra.mxu0 0.0
    %379 = vmatprep.subr.mxu0 0.0
    %380 = vmatpush1.msra.mxu0 0.0
    %381 = vmatprep.subr.mxu0 0.0
    %382 = vmatpush1.msra.mxu0 0.0
    %383 = vmatprep.subr.mxu0 0.0
    %384 = vmatpush1.msra.mxu0 0.0
    %385 = vmatprep.subr.mxu0 0.0
    %386 = vmatpush1.msra.mxu0 0.0
    %387 = vmatprep.subr.mxu0 0.0
    %388 = vmatpush1.msra.mxu0 0.0
    %389 = vmatprep.subr.mxu0 0.0
    %390 = vmatpush1.msra.mxu0 0.0
    %391 = vmatprep.subr.mxu0 0.0
    %392 = vmatpush1.msra.mxu0 0.0
    %393 = vmatprep.subr.mxu0 0.0
    %394 = vmatpush1.msra.mxu0 0.0
    %395 = vmatprep.subr.mxu0 0.0
    %396 = vmatpush1.msra.mxu0 0.0
    %397 = vmatprep.subr.mxu0 0.0
    %398 = vmatpush1.msra.mxu0 0.0
    %399 = vmatprep.subr.mxu0 0.0
    %400 = vmatpush1.msra.mxu0 0.0
    %401 = vmatprep.mubr.f32.mxu0 0.0
    %402 = vmatmul.mubr.f32.gmra.mrb[0].mxu0 %v335
    %v403 = vpop.f32.mrb[0].mxu0
    %v404 = vadd.f32 0.0, %v403
    %v405 = vpop.f32.mrb[0].mxu0
    %v406 = vadd.f32 0.0, %v405
    %407 = vdwg.mxu0
    %v410 = vrot.slane %v404, 6
    %v411 = vrot.slane %v406, 6
    %v414 = vadd.f32 %v173, %v410
    %v415 = vadd.f32 %v175, %v411
    %v416 = vxor.u32 %v414, 2147483648
    %v417 = vxor.u32 %v415, 2147483648
    %v418 = vmul.f32 %v416, 1.442695
    %v419 = vpow.pop %v418
    %v420 = vmul.f32 %v417, 1.442695
    %v421 = vpow.pop %v420
    %v422 = vadd.f32 %v419, 1.0
    %v423 = vadd.f32 %v421, 1.0
    %v424 = vrcp.pop %v422
    %v425 = vmul.f32 1.0, %v424
    %v426 = vrcp.pop %v423
    %v427 = vmul.f32 1.0, %v426
    %v428 = vtanh.pop %v415
    %v430 = vrot.slane %v326, 7
    %v432 = vmul.f32 %v425, %v430
    %434 = vrot.lane.b32.xlu0 %v428, 64
    %v435 = vpop.permute.xlu0 %434
    %v437 = vmul.f32 %v425, %v435
    %439 = vrot.lane.b32.xlu0 %v437, 64
    %v440 = vpop.permute.xlu0 %439
    %v442 = vadd.f32 %v432, %v440
    %v443 = vtanh.pop %v442
    %445 = vrot.lane.b32.xlu0 %v443, 64
    %v446 = vpop.permute.xlu0 %445
    %v448 = vmul.f32 %v427, %v446
    %v450 = vrot.slane %v448, 2
    %v451 = vsel %vm102, %v450, 0
    %453 = vmatprep.subr.mxu0 %v60
    %454 = vmatpush1.msra.mxu0 %v59
    %455 = vmatprep.subr.mxu0 %v62
    %456 = vmatpush1.msra.mxu0 %v61
    %457 = vmatprep.subr.mxu0 %v64
    %458 = vmatpush1.msra.mxu0 %v63
    %459 = vmatprep.subr.mxu0 %v66
    %460 = vmatpush1.msra.mxu0 %v65
    %461 = vmatprep.subr.mxu0 %v68
    %462 = vmatpush1.msra.mxu0 %v67
    %463 = vmatprep.subr.mxu0 %v70
    %464 = vmatpush1.msra.mxu0 %v69
    %465 = vmatprep.subr.mxu0 %v72
    %466 = vmatpush1.msra.mxu0 %v71
    %467 = vmatprep.subr.mxu0 %v74
    %468 = vmatpush1.msra.mxu0 %v73
    %469 = vmatprep.subr.mxu0 0.0
    %470 = vmatpush1.msra.mxu0 0.0
    %471 = vmatprep.subr.mxu0 0.0
    %472 = vmatpush1.msra.mxu0 0.0
    %473 = vmatprep.subr.mxu0 0.0
    %474 = vmatpush1.msra.mxu0 0.0
    %475 = vmatprep.subr.mxu0 0.0
    %476 = vmatpush1.msra.mxu0 0.0
    %477 = vmatprep.subr.mxu0 0.0
    %478 = vmatpush1.msra.mxu0 0.0
    %479 = vmatprep.subr.mxu0 0.0
    %480 = vmatpush1.msra.mxu0 0.0
    %481 = vmatprep.subr.mxu0 0.0
    %482 = vmatpush1.msra.mxu0 0.0
    %483 = vmatprep.subr.mxu0 0.0
    %484 = vmatpush1.msra.mxu0 0.0
    %485 = vmatprep.subr.mxu0 0.0
    %486 = vmatpush1.msra.mxu0 0.0
    %487 = vmatprep.subr.mxu0 0.0
    %488 = vmatpush1.msra.mxu0 0.0
    %489 = vmatprep.subr.mxu0 0.0
    %490 = vmatpush1.msra.mxu0 0.0
    %491 = vmatprep.subr.mxu0 0.0
    %492 = vmatpush1.msra.mxu0 0.0
    %493 = vmatprep.subr.mxu0 0.0
    %494 = vmatpush1.msra.mxu0 0.0
    %495 = vmatprep.subr.mxu0 0.0
    %496 = vmatpush1.msra.mxu0 0.0
    %497 = vmatprep.subr.mxu0 0.0
    %498 = vmatpush1.msra.mxu0 0.0
    %499 = vmatprep.subr.mxu0 0.0
    %500 = vmatpush1.msra.mxu0 0.0
    %501 = vmatprep.subr.mxu0 0.0
    %502 = vmatpush1.msra.mxu0 0.0
    %503 = vmatprep.subr.mxu0 0.0
    %504 = vmatpush1.msra.mxu0 0.0
    %505 = vmatprep.subr.mxu0 0.0
    %506 = vmatpush1.msra.mxu0 0.0
    %507 = vmatprep.subr.mxu0 0.0
    %508 = vmatpush1.msra.mxu0 0.0
    %509 = vmatprep.subr.mxu0 0.0
    %510 = vmatpush1.msra.mxu0 0.0
    %511 = vmatprep.subr.mxu0 0.0
    %512 = vmatpush1.msra.mxu0 0.0
    %513 = vmatprep.subr.mxu0 0.0
    %514 = vmatpush1.msra.mxu0 0.0
    %515 = vmatprep.subr.mxu0 0.0
    %516 = vmatpush1.msra.mxu0 0.0
    %517 = vmatprep.mubr.f32.mxu0 0.0
    %518 = vmatmul.mubr.f32.gmra.mrb[0].mxu0 %v451
    %v519 = vpop.f32.mrb[0].mxu0
    %v520 = vadd.f32 0.0, %v519
    %v521 = vpop.f32.mrb[0].mxu0
    %v522 = vadd.f32 0.0, %v521
    %523 = vdwg.mxu0
    %v526 = vrot.slane %v520, 5
    %v527 = vrot.slane %v522, 5
    %v530 = vadd.f32 %v173, %v526
    %v531 = vadd.f32 %v175, %v527
    %v532 = vxor.u32 %v530, 2147483648
    %v533 = vxor.u32 %v531, 2147483648
    %v534 = vmul.f32 %v532, 1.442695
    %v535 = vpow.pop %v534
    %v536 = vmul.f32 %v533, 1.442695
    %v537 = vpow.pop %v536
    %v538 = vadd.f32 %v535, 1.0
    %v539 = vadd.f32 %v537, 1.0
    %v540 = vrcp.pop %v538
    %v541 = vmul.f32 1.0, %v540
    %v542 = vrcp.pop %v539
    %v543 = vmul.f32 1.0, %v542
    %v544 = vtanh.pop %v531
    %v546 = vrot.slane %v442, 7
    %v548 = vmul.f32 %v541, %v546
    %550 = vrot.lane.b32.xlu0 %v544, 64
    %v551 = vpop.permute.xlu0 %550
    %v553 = vmul.f32 %v541, %v551
    %555 = vrot.lane.b32.xlu0 %v553, 64
    %v556 = vpop.permute.xlu0 %555
    %v558 = vadd.f32 %v548, %v556
    %v559 = vtanh.pop %v558
    %561 = vrot.lane.b32.xlu0 %v559, 64
    %v562 = vpop.permute.xlu0 %561
    %v564 = vmul.f32 %v543, %v562
    %v566 = vrot.slane %v564, 3
    %v567 = vsel %vm102, %v566, 0
    %569 = vmatprep.subr.mxu0 %v60
    %570 = vmatpush1.msra.mxu0 %v59
    %571 = vmatprep.subr.mxu0 %v62
    %572 = vmatpush1.msra.mxu0 %v61
    %573 = vmatprep.subr.mxu0 %v64
    %574 = vmatpush1.msra.mxu0 %v63
    %575 = vmatprep.subr.mxu0 %v66
    %576 = vmatpush1.msra.mxu0 %v65
    %577 = vmatprep.subr.mxu0 %v68
    %578 = vmatpush1.msra.mxu0 %v67
    %579 = vmatprep.subr.mxu0 %v70
    %580 = vmatpush1.msra.mxu0 %v69
    %581 = vmatprep.subr.mxu0 %v72
    %582 = vmatpush1.msra.mxu0 %v71
    %583 = vmatprep.subr.mxu0 %v74
    %584 = vmatpush1.msra.mxu0 %v73
    %585 = vmatprep.subr.mxu0 0.0
    %586 = vmatpush1.msra.mxu0 0.0
    %587 = vmatprep.subr.mxu0 0.0
    %588 = vmatpush1.msra.mxu0 0.0
    %589 = vmatprep.subr.mxu0 0.0
    %590 = vmatpush1.msra.mxu0 0.0
    %591 = vmatprep.subr.mxu0 0.0
    %592 = vmatpush1.msra.mxu0 0.0
    %593 = vmatprep.subr.mxu0 0.0
    %594 = vmatpush1.msra.mxu0 0.0
    %595 = vmatprep.subr.mxu0 0.0
    %596 = vmatpush1.msra.mxu0 0.0
    %597 = vmatprep.subr.mxu0 0.0
    %598 = vmatpush1.msra.mxu0 0.0
    %599 = vmatprep.subr.mxu0 0.0
    %600 = vmatpush1.msra.mxu0 0.0
    %601 = vmatprep.subr.mxu0 0.0
    %602 = vmatpush1.msra.mxu0 0.0
    %603 = vmatprep.subr.mxu0 0.0
    %604 = vmatpush1.msra.mxu0 0.0
    %605 = vmatprep.subr.mxu0 0.0
    %606 = vmatpush1.msra.mxu0 0.0
    %607 = vmatprep.subr.mxu0 0.0
    %608 = vmatpush1.msra.mxu0 0.0
    %609 = vmatprep.subr.mxu0 0.0
    %610 = vmatpush1.msra.mxu0 0.0
    %611 = vmatprep.subr.mxu0 0.0
    %612 = vmatpush1.msra.mxu0 0.0
    %613 = vmatprep.subr.mxu0 0.0
    %614 = vmatpush1.msra.mxu0 0.0
    %615 = vmatprep.subr.mxu0 0.0
    %616 = vmatpush1.msra.mxu0 0.0
    %617 = vmatprep.subr.mxu0 0.0
    %618 = vmatpush1.msra.mxu0 0.0
    %619 = vmatprep.subr.mxu0 0.0
    %620 = vmatpush1.msra.mxu0 0.0
    %621 = vmatprep.subr.mxu0 0.0
    %622 = vmatpush1.msra.mxu0 0.0
    %623 = vmatprep.subr.mxu0 0.0
    %624 = vmatpush1.msra.mxu0 0.0
    %625 = vmatprep.subr.mxu0 0.0
    %626 = vmatpush1.msra.mxu0 0.0
    %627 = vmatprep.subr.mxu0 0.0
    %628 = vmatpush1.msra.mxu0 0.0
    %629 = vmatprep.subr.mxu0 0.0
    %630 = vmatpush1.msra.mxu0 0.0
    %631 = vmatprep.subr.mxu0 0.0
    %632 = vmatpush1.msra.mxu0 0.0
    %633 = vmatprep.mubr.f32.mxu0 0.0
    %634 = vmatmul.mubr.f32.gmra.mrb[0].mxu0 %v567
    %v635 = vpop.f32.mrb[0].mxu0
    %v636 = vadd.f32 0.0, %v635
    %v637 = vpop.f32.mrb[0].mxu0
    %v638 = vadd.f32 0.0, %v637
    %639 = vdwg.mxu0
    %v642 = vrot.slane %v636, 4
    %v643 = vrot.slane %v638, 4
    %v646 = vadd.f32 %v173, %v642
    %v647 = vadd.f32 %v175, %v643
    %v648 = vxor.u32 %v646, 2147483648
    %v649 = vxor.u32 %v647, 2147483648
    %v650 = vmul.f32 %v648, 1.442695
    %v651 = vpow.pop %v650
    %v652 = vmul.f32 %v649, 1.442695
    %v653 = vpow.pop %v652
    %v654 = vadd.f32 %v651, 1.0
    %v655 = vadd.f32 %v653, 1.0
    %v656 = vrcp.pop %v654
    %v657 = vmul.f32 1.0, %v656
    %v658 = vrcp.pop %v655
    %v659 = vmul.f32 1.0, %v658
    %v660 = vtanh.pop %v647
    %v662 = vrot.slane %v558, 7
    %v664 = vmul.f32 %v657, %v662
    %666 = vrot.lane.b32.xlu0 %v660, 64
    %v667 = vpop.permute.xlu0 %666
    %v669 = vmul.f32 %v657, %v667
    %671 = vrot.lane.b32.xlu0 %v669, 64
    %v672 = vpop.permute.xlu0 %671
    %v674 = vadd.f32 %v664, %v672
    %v675 = vtanh.pop %v674
    %677 = vrot.lane.b32.xlu0 %v675, 64
    %v678 = vpop.permute.xlu0 %677
    %v680 = vmul.f32 %v659, %v678
    %v682 = vrot.slane %v680, 4
    %v683 = vsel %vm102, %v682, 0
    %685 = vmatprep.subr.mxu0 %v60
    %686 = vmatpush1.msra.mxu0 %v59
    %687 = vmatprep.subr.mxu0 %v62
    %688 = vmatpush1.msra.mxu0 %v61
    %689 = vmatprep.subr.mxu0 %v64
    %690 = vmatpush1.msra.mxu0 %v63
    %691 = vmatprep.subr.mxu0 %v66
    %692 = vmatpush1.msra.mxu0 %v65
    %693 = vmatprep.subr.mxu0 %v68
    %694 = vmatpush1.msra.mxu0 %v67
    %695 = vmatprep.subr.mxu0 %v70
    %696 = vmatpush1.msra.mxu0 %v69
    %697 = vmatprep.subr.mxu0 %v72
    %698 = vmatpush1.msra.mxu0 %v71
    %699 = vmatprep.subr.mxu0 %v74
    %700 = vmatpush1.msra.mxu0 %v73
    %701 = vmatprep.subr.mxu0 0.0
    %702 = vmatpush1.msra.mxu0 0.0
    %703 = vmatprep.subr.mxu0 0.0
    %704 = vmatpush1.msra.mxu0 0.0
    %705 = vmatprep.subr.mxu0 0.0
    %706 = vmatpush1.msra.mxu0 0.0
    %707 = vmatprep.subr.mxu0 0.0
    %708 = vmatpush1.msra.mxu0 0.0
    %709 = vmatprep.subr.mxu0 0.0
    %710 = vmatpush1.msra.mxu0 0.0
    %711 = vmatprep.subr.mxu0 0.0
    %712 = vmatpush1.msra.mxu0 0.0
    %713 = vmatprep.subr.mxu0 0.0
    %714 = vmatpush1.msra.mxu0 0.0
    %715 = vmatprep.subr.mxu0 0.0
    %716 = vmatpush1.msra.mxu0 0.0
    %717 = vmatprep.subr.mxu0 0.0
    %718 = vmatpush1.msra.mxu0 0.0
    %719 = vmatprep.subr.mxu0 0.0
    %720 = vmatpush1.msra.mxu0 0.0
    %721 = vmatprep.subr.mxu0 0.0
    %722 = vmatpush1.msra.mxu0 0.0
    %723 = vmatprep.subr.mxu0 0.0
    %724 = vmatpush1.msra.mxu0 0.0
    %725 = vmatprep.subr.mxu0 0.0
    %726 = vmatpush1.msra.mxu0 0.0
    %727 = vmatprep.subr.mxu0 0.0
    %728 = vmatpush1.msra.mxu0 0.0
    %729 = vmatprep.subr.mxu0 0.0
    %730 = vmatpush1.msra.mxu0 0.0
    %731 = vmatprep.subr.mxu0 0.0
    %732 = vmatpush1.msra.mxu0 0.0
    %733 = vmatprep.subr.mxu0 0.0
    %734 = vmatpush1.msra.mxu0 0.0
    %735 = vmatprep.subr.mxu0 0.0
    %736 = vmatpush1.msra.mxu0 0.0
    %737 = vmatprep.subr.mxu0 0.0
    %738 = vmatpush1.msra.mxu0 0.0
    %739 = vmatprep.subr.mxu0 0.0
    %740 = vmatpush1.msra.mxu0 0.0
    %741 = vmatprep.subr.mxu0 0.0
    %742 = vmatpush1.msra.mxu0 0.0
    %743 = vmatprep.subr.mxu0 0.0
    %744 = vmatpush1.msra.mxu0 0.0
    %745 = vmatprep.subr.mxu0 0.0
    %746 = vmatpush1.msra.mxu0 0.0
    %747 = vmatprep.subr.mxu0 0.0
    %748 = vmatpush1.msra.mxu0 0.0
    %749 = vmatprep.mubr.f32.mxu0 0.0
    %750 = vmatmul.mubr.f32.gmra.mrb[0].mxu0 %v683
    %v751 = vpop.f32.mrb[0].mxu0
    %v752 = vadd.f32 0.0, %v751
    %v753 = vpop.f32.mrb[0].mxu0
    %v754 = vadd.f32 0.0, %v753
    %755 = vdwg.mxu0
    %v758 = vrot.slane %v752, 3
    %v759 = vrot.slane %v754, 3
    %v762 = vadd.f32 %v173, %v758
    %v763 = vadd.f32 %v175, %v759
    %v764 = vxor.u32 %v762, 2147483648
    %v765 = vxor.u32 %v763, 2147483648
    %v766 = vmul.f32 %v764, 1.442695
    %v767 = vpow.pop %v766
    %v768 = vmul.f32 %v765, 1.442695
    %v769 = vpow.pop %v768
    %v770 = vadd.f32 %v767, 1.0
    %v771 = vadd.f32 %v769, 1.0
    %v772 = vrcp.pop %v770
    %v773 = vmul.f32 1.0, %v772
    %v774 = vrcp.pop %v771
    %v775 = vmul.f32 1.0, %v774
    %v776 = vtanh.pop %v763
    %v778 = vrot.slane %v674, 7
    %v780 = vmul.f32 %v773, %v778
    %782 = vrot.lane.b32.xlu0 %v776, 64
    %v783 = vpop.permute.xlu0 %782
    %v785 = vmul.f32 %v773, %v783
    %787 = vrot.lane.b32.xlu0 %v785, 64
    %v788 = vpop.permute.xlu0 %787
    %v790 = vadd.f32 %v780, %v788
    %v791 = vtanh.pop %v790
    %793 = vrot.lane.b32.xlu0 %v791, 64
    %v794 = vpop.permute.xlu0 %793
    %v796 = vmul.f32 %v775, %v794
    %v798 = vrot.slane %v796, 5
    %v799 = vsel %vm102, %v798, 0
    %801 = vmatprep.subr.mxu0 %v60
    %802 = vmatpush1.msra.mxu0 %v59
    %803 = vmatprep.subr.mxu0 %v62
    %804 = vmatpush1.msra.mxu0 %v61
    %805 = vmatprep.subr.mxu0 %v64
    %806 = vmatpush1.msra.mxu0 %v63
    %807 = vmatprep.subr.mxu0 %v66
    %808 = vmatpush1.msra.mxu0 %v65
    %809 = vmatprep.subr.mxu0 %v68
    %810 = vmatpush1.msra.mxu0 %v67
    %811 = vmatprep.subr.mxu0 %v70
    %812 = vmatpush1.msra.mxu0 %v69
    %813 = vmatprep.subr.mxu0 %v72
    %814 = vmatpush1.msra.mxu0 %v71
    %815 = vmatprep.subr.mxu0 %v74
    %816 = vmatpush1.msra.mxu0 %v73
    %817 = vmatprep.subr.mxu0 0.0
    %818 = vmatpush1.msra.mxu0 0.0
    %819 = vmatprep.subr.mxu0 0.0
    %820 = vmatpush1.msra.mxu0 0.0
    %821 = vmatprep.subr.mxu0 0.0
    %822 = vmatpush1.msra.mxu0 0.0
    %823 = vmatprep.subr.mxu0 0.0
    %824 = vmatpush1.msra.mxu0 0.0
    %825 = vmatprep.subr.mxu0 0.0
    %826 = vmatpush1.msra.mxu0 0.0
    %827 = vmatprep.subr.mxu0 0.0
    %828 = vmatpush1.msra.mxu0 0.0
    %829 = vmatprep.subr.mxu0 0.0
    %830 = vmatpush1.msra.mxu0 0.0
    %831 = vmatprep.subr.mxu0 0.0
    %832 = vmatpush1.msra.mxu0 0.0
    %833 = vmatprep.subr.mxu0 0.0
    %834 = vmatpush1.msra.mxu0 0.0
    %835 = vmatprep.subr.mxu0 0.0
    %836 = vmatpush1.msra.mxu0 0.0
    %837 = vmatprep.subr.mxu0 0.0
    %838 = vmatpush1.msra.mxu0 0.0
    %839 = vmatprep.subr.mxu0 0.0
    %840 = vmatpush1.msra.mxu0 0.0
    %841 = vmatprep.subr.mxu0 0.0
    %842 = vmatpush1.msra.mxu0 0.0
    %843 = vmatprep.subr.mxu0 0.0
    %844 = vmatpush1.msra.mxu0 0.0
    %845 = vmatprep.subr.mxu0 0.0
    %846 = vmatpush1.msra.mxu0 0.0
    %847 = vmatprep.subr.mxu0 0.0
    %848 = vmatpush1.msra.mxu0 0.0
    %849 = vmatprep.subr.mxu0 0.0
    %850 = vmatpush1.msra.mxu0 0.0
    %851 = vmatprep.subr.mxu0 0.0
    %852 = vmatpush1.msra.mxu0 0.0
    %853 = vmatprep.subr.mxu0 0.0
    %854 = vmatpush1.msra.mxu0 0.0
    %855 = vmatprep.subr.mxu0 0.0
    %856 = vmatpush1.msra.mxu0 0.0
    %857 = vmatprep.subr.mxu0 0.0
    %858 = vmatpush1.msra.mxu0 0.0
    %859 = vmatprep.subr.mxu0 0.0
    %860 = vmatpush1.msra.mxu0 0.0
    %861 = vmatprep.subr.mxu0 0.0
    %862 = vmatpush1.msra.mxu0 0.0
    %863 = vmatprep.subr.mxu0 0.0
    %864 = vmatpush1.msra.mxu0 0.0
    %865 = vmatprep.mubr.f32.mxu0 0.0
    %866 = vmatmul.mubr.f32.gmra.mrb[0].mxu0 %v799
    %v867 = vpop.f32.mrb[0].mxu0
    %v868 = vadd.f32 0.0, %v867
    %v869 = vpop.f32.mrb[0].mxu0
    %v870 = vadd.f32 0.0, %v869
    %871 = vdwg.mxu0
    %v874 = vrot.slane %v868, 2
    %v875 = vrot.slane %v870, 2
    %v878 = vadd.f32 %v173, %v874
    %v879 = vadd.f32 %v175, %v875
    %v880 = vxor.u32 %v878, 2147483648
    %v881 = vxor.u32 %v879, 2147483648
    %v882 = vmul.f32 %v880, 1.442695
    %v883 = vpow.pop %v882
    %v884 = vmul.f32 %v881, 1.442695
    %v885 = vpow.pop %v884
    %v886 = vadd.f32 %v883, 1.0
    %v887 = vadd.f32 %v885, 1.0
    %v888 = vrcp.pop %v886
    %v889 = vmul.f32 1.0, %v888
    %v890 = vrcp.pop %v887
    %v891 = vmul.f32 1.0, %v890
    %v892 = vtanh.pop %v879
    %v894 = vrot.slane %v790, 7
    %v896 = vmul.f32 %v889, %v894
    %898 = vrot.lane.b32.xlu0 %v892, 64
    %v899 = vpop.permute.xlu0 %898
    %v901 = vmul.f32 %v889, %v899
    %903 = vrot.lane.b32.xlu0 %v901, 64
    %v904 = vpop.permute.xlu0 %903
    %v906 = vadd.f32 %v896, %v904
    %v907 = vtanh.pop %v906
    %909 = vrot.lane.b32.xlu0 %v907, 64
    %v910 = vpop.permute.xlu0 %909
    %v912 = vmul.f32 %v891, %v910
    %v914 = vrot.slane %v912, 6
    %v915 = vsel %vm102, %v914, 0
    %917 = vmatprep.subr.mxu0 %v60
    %918 = vmatpush1.msra.mxu0 %v59
    %919 = vmatprep.subr.mxu0 %v62
    %920 = vmatpush1.msra.mxu0 %v61
    %921 = vmatprep.subr.mxu0 %v64
    %922 = vmatpush1.msra.mxu0 %v63
    %923 = vmatprep.subr.mxu0 %v66
    %924 = vmatpush1.msra.mxu0 %v65
    %925 = vmatprep.subr.mxu0 %v68
    %926 = vmatpush1.msra.mxu0 %v67
    %927 = vmatprep.subr.mxu0 %v70
    %928 = vmatpush1.msra.mxu0 %v69
    %929 = vmatprep.subr.mxu0 %v72
    %930 = vmatpush1.msra.mxu0 %v71
    %931 = vmatprep.subr.mxu0 %v74
    %932 = vmatpush1.msra.mxu0 %v73
    %933 = vmatprep.subr.mxu0 0.0
    %934 = vmatpush1.msra.mxu0 0.0
    %935 = vmatprep.subr.mxu0 0.0
    %936 = vmatpush1.msra.mxu0 0.0
    %937 = vmatprep.subr.mxu0 0.0
    %938 = vmatpush1.msra.mxu0 0.0
    %939 = vmatprep.subr.mxu0 0.0
    %940 = vmatpush1.msra.mxu0 0.0
    %941 = vmatprep.subr.mxu0 0.0
    %942 = vmatpush1.msra.mxu0 0.0
    %943 = vmatprep.subr.mxu0 0.0
    %944 = vmatpush1.msra.mxu0 0.0
    %945 = vmatprep.subr.mxu0 0.0
    %946 = vmatpush1.msra.mxu0 0.0
    %947 = vmatprep.subr.mxu0 0.0
    %948 = vmatpush1.msra.mxu0 0.0
    %949 = vmatprep.subr.mxu0 0.0
    %950 = vmatpush1.msra.mxu0 0.0
    %951 = vmatprep.subr.mxu0 0.0
    %952 = vmatpush1.msra.mxu0 0.0
    %953 = vmatprep.subr.mxu0 0.0
    %954 = vmatpush1.msra.mxu0 0.0
    %955 = vmatprep.subr.mxu0 0.0
    %956 = vmatpush1.msra.mxu0 0.0
    %957 = vmatprep.subr.mxu0 0.0
    %958 = vmatpush1.msra.mxu0 0.0
    %959 = vmatprep.subr.mxu0 0.0
    %960 = vmatpush1.msra.mxu0 0.0
    %961 = vmatprep.subr.mxu0 0.0
    %962 = vmatpush1.msra.mxu0 0.0
    %963 = vmatprep.subr.mxu0 0.0
    %964 = vmatpush1.msra.mxu0 0.0
    %965 = vmatprep.subr.mxu0 0.0
    %966 = vmatpush1.msra.mxu0 0.0
    %967 = vmatprep.subr.mxu0 0.0
    %968 = vmatpush1.msra.mxu0 0.0
    %969 = vmatprep.subr.mxu0 0.0
    %970 = vmatpush1.msra.mxu0 0.0
    %971 = vmatprep.subr.mxu0 0.0
    %972 = vmatpush1.msra.mxu0 0.0
    %973 = vmatprep.subr.mxu0 0.0
    %974 = vmatpush1.msra.mxu0 0.0
    %975 = vmatprep.subr.mxu0 0.0
    %976 = vmatpush1.msra.mxu0 0.0
    %977 = vmatprep.subr.mxu0 0.0
    %978 = vmatpush1.msra.mxu0 0.0
    %979 = vmatprep.subr.mxu0 0.0
    %980 = vmatpush1.msra.mxu0 0.0
    %981 = vmatprep.mubr.f32.mxu0 0.0
    %982 = vmatmul.mubr.f32.gmra.mrb[0].mxu0 %v915
    %v983 = vpop.f32.mrb[0].mxu0
    %v984 = vadd.f32 0.0, %v983
    %v985 = vpop.f32.mrb[0].mxu0
    %v986 = vadd.f32 0.0, %v985
    %987 = vdwg.mxu0
    %v990 = vrot.slane %v984, 1
    %v991 = vrot.slane %v986, 1
    %v994 = vadd.f32 %v173, %v990
    %v995 = vadd.f32 %v175, %v991
    %v996 = vxor.u32 %v994, 2147483648
    %v997 = vxor.u32 %v995, 2147483648
    %v998 = vmul.f32 %v996, 1.442695
    %v999 = vpow.pop %v998
    %v1000 = vmul.f32 %v997, 1.442695
    %v1001 = vpow.pop %v1000
    %v1002 = vadd.f32 %v999, 1.0
    %v1003 = vadd.f32 %v1001, 1.0
    %v1004 = vrcp.pop %v1002
    %v1005 = vmul.f32 1.0, %v1004
    %v1006 = vrcp.pop %v1003
    %v1007 = vmul.f32 1.0, %v1006
    %v1008 = vtanh.pop %v995
    %v1010 = vrot.slane %v906, 7
    %v1012 = vmul.f32 %v1005, %v1010
    %1014 = vrot.lane.b32.xlu0 %v1008, 64
    %v1015 = vpop.permute.xlu0 %1014
    %v1017 = vmul.f32 %v1005, %v1015
    %1019 = vrot.lane.b32.xlu0 %v1017, 64
    %v1020 = vpop.permute.xlu0 %1019
    %v1022 = vadd.f32 %v1012, %v1020
    %v1023 = vtanh.pop %v1022
    %1025 = vrot.lane.b32.xlu0 %v1023, 64
    %v1026 = vpop.permute.xlu0 %1025
    %v1028 = vmul.f32 %v1007, %v1026
    %v1030 = vrot.slane %v1028, 7
    %v1031 = vsel %vm102, %v1030, 0
    %1033 = vmatprep.subr.mxu0 %v60
    %1034 = vmatpush1.msra.mxu0 %v59
    %1035 = vmatprep.subr.mxu0 %v62
    %1036 = vmatpush1.msra.mxu0 %v61
    %1037 = vmatprep.subr.mxu0 %v64
    %1038 = vmatpush1.msra.mxu0 %v63
    %1039 = vmatprep.subr.mxu0 %v66
    %1040 = vmatpush1.msra.mxu0 %v65
    %1041 = vmatprep.subr.mxu0 %v68
    %1042 = vmatpush1.msra.mxu0 %v67
    %1043 = vmatprep.subr.mxu0 %v70
    %1044 = vmatpush1.msra.mxu0 %v69
    %1045 = vmatprep.subr.mxu0 %v72
    %1046 = vmatpush1.msra.mxu0 %v71
    %1047 = vmatprep.subr.mxu0 %v74
    %1048 = vmatpush1.msra.mxu0 %v73
    %1049 = vmatprep.subr.mxu0 0.0
    %1050 = vmatpush1.msra.mxu0 0.0
    %1051 = vmatprep.subr.mxu0 0.0
    %1052 = vmatpush1.msra.mxu0 0.0
    %1053 = vmatprep.subr.mxu0 0.0
    %1054 = vmatpush1.msra.mxu0 0.0
    %1055 = vmatprep.subr.mxu0 0.0
    %1056 = vmatpush1.msra.mxu0 0.0
    %1057 = vmatprep.subr.mxu0 0.0
    %1058 = vmatpush1.msra.mxu0 0.0
    %1059 = vmatprep.subr.mxu0 0.0
    %1060 = vmatpush1.msra.mxu0 0.0
    %1061 = vmatprep.subr.mxu0 0.0
    %1062 = vmatpush1.msra.mxu0 0.0
    %1063 = vmatprep.subr.mxu0 0.0
    %1064 = vmatpush1.msra.mxu0 0.0
    %1065 = vmatprep.subr.mxu0 0.0
    %1066 = vmatpush1.msra.mxu0 0.0
    %1067 = vmatprep.subr.mxu0 0.0
    %1068 = vmatpush1.msra.mxu0 0.0
    %1069 = vmatprep.subr.mxu0 0.0
    %1070 = vmatpush1.msra.mxu0 0.0
    %1071 = vmatprep.subr.mxu0 0.0
    %1072 = vmatpush1.msra.mxu0 0.0
    %1073 = vmatprep.subr.mxu0 0.0
    %1074 = vmatpush1.msra.mxu0 0.0
    %1075 = vmatprep.subr.mxu0 0.0
    %1076 = vmatpush1.msra.mxu0 0.0
    %1077 = vmatprep.subr.mxu0 0.0
    %1078 = vmatpush1.msra.mxu0 0.0
    %1079 = vmatprep.subr.mxu0 0.0
    %1080 = vmatpush1.msra.mxu0 0.0
    %1081 = vmatprep.subr.mxu0 0.0
    %1082 = vmatpush1.msra.mxu0 0.0
    %1083 = vmatprep.subr.mxu0 0.0
    %1084 = vmatpush1.msra.mxu0 0.0
    %1085 = vmatprep.subr.mxu0 0.0
    %1086 = vmatpush1.msra.mxu0 0.0
    %1087 = vmatprep.subr.mxu0 0.0
    %1088 = vmatpush1.msra.mxu0 0.0
    %1089 = vmatprep.subr.mxu0 0.0
    %1090 = vmatpush1.msra.mxu0 0.0
    %1091 = vmatprep.subr.mxu0 0.0
    %1092 = vmatpush1.msra.mxu0 0.0
    %1093 = vmatprep.subr.mxu0 0.0
    %1094 = vmatpush1.msra.mxu0 0.0
    %1095 = vmatprep.subr.mxu0 0.0
    %1096 = vmatpush1.msra.mxu0 0.0
    %1097 = vmatprep.mubr.f32.mxu0 0.0
    %1098 = vmatmul.mubr.f32.gmra.mrb[0].mxu0 %v1031
    %v1099 = vpop.f32.mrb[0].mxu0
    %v1100 = vadd.f32 0.0, %v1099
    %v1101 = vpop.f32.mrb[0].mxu0
    %v1102 = vadd.f32 0.0, %v1101
    %1103 = vdwg.mxu0
    %v1106 = vcombine.low %v1100, %v1102
    %v1108 = vunpack.c.l.s4 1966171168
    %v1109 = vunpack.c.0.s8 %v1108
    %v1110 = vlaneseq
    %v1111 = vshrl.u32 %v1110, 7
    %v1112 = vsub.s32 %v1109, %v1111
    %v1113 = vrot.slane %v1106, %v1112
    %v1115 = vunpack.c.l.s4 1966171168
    %v1116 = vunpack.c.0.s8 %v1115
    %v1117 = vlaneseq
    %v1118 = vshrl.u32 %v1117, 7
    %v1119 = vsub.s32 %v1116, %v1118
    %v1120 = vrot.slane %v1113, %v1119
    %v1122 = vadd.f32 %v58, %v1120
    %v1123 = vxor.u32 %v1122, 2147483648
    %v1124 = vmul.f32 %v1123, 1.442695
    %v1125 = vpow.pop %v1124
    %v1126 = vadd.f32 %v1125, 1.0
    %v1127 = vrcp.pop %v1126
    %v1128 = vmul.f32 1.0, %v1127
    %1130 = vrot.lane.b32.xlu0 %v1122, 64
    %v1131 = vpop.permute.xlu0 %1130
    %v1132 = vrot.slane %v1131, 1
    %v1134 = vtanh.pop %v1132
    %v1136 = vcombine.high %v1022, %v1022
    %v1138 = vunpack.c.l.s4 1966171168
    %v1139 = vunpack.c.0.s8 %v1138
    %v1140 = vlaneseq
    %v1141 = vshrl.u32 %v1140, 7
    %v1142 = vsub.s32 %v1139, %v1141
    %v1143 = vrot.slane %v1136, %v1142
    %v1144 = vcombine.high %v1143, %v1143
    %v1146 = vunpack.c.l.s4 1966171168
    %v1147 = vunpack.c.0.s8 %v1146
    %v1148 = vlaneseq
    %v1149 = vshrl.u32 %v1148, 7
    %v1150 = vsub.s32 %v1147, %v1149
    %v1151 = vrot.slane %v1144, %v1150
    %v1152 = vcombine.high %v1151, %v1151
    %v1154 = vmul.f32 %v1128, %v1152
    %v1155 = vmul.f32 %v1128, %v1134
    %1157 = vrot.lane.b32.xlu0 %v1155, 64
    %v1158 = vpop.permute.xlu0 %1157
    %v1160 = vadd.f32 %v1154, %v1158
    %v1161 = vtanh.pop %v1160
    %v1163 = vrot.slane %v1128, 1
    %1166 = vrot.lane.b32.xlu0 %v1161, 64
    %v1167 = vpop.permute.xlu0 %1166
    %v1169 = vmul.f32 %v1163, %v1167
    %v1171 = vlaneseq
    %v1172 = vshrl.u32 %v1171, 7
    %v1173 = vsub.s32 0, %v1172
    %v1174 = vrot.slane %v1169, %v1173
    %1175 = vrot.lane.b32.xlu0 %v1174, 96
    %v1176 = vpop.permute.xlu0 %1175
    %vm1178 = vcmask 253952
    %1179 = vst.msk [vmem:[#allocation8] sm:$0x1] %vm1178, %v1176
    // Predicated region
    $region30: #{tpu_custom_call.1} parent=1 // pred_check
      _
    $region31: #{tpu_custom_call.1} parent=1 // pred_check_branch
      %1181 = sbr.rel (0) target = $region33
    $region32: #{tpu_custom_call.1} parent=1 // pred_region
      %s1183 = ssub.s32 16, 16
      %1184 = vsyncadd [#allocation4], %s1183
      %s1186 = sshll.u32 [#allocation8], 4
      %s1187 = int_to_ptr.vmem [resolvable:$true] %s1186
      %1189 = dma.vmem_to_hbm [thread:$0]  %s1187, 16, %s4, [#allocation4]
    $region33: #{tpu_custom_call.1} parent=1 // pred_fallthru
      _
    // Predicated region
    $region34: #{tpu_custom_call.1} parent=1 // pred_check
      _
    $region35: #{tpu_custom_call.1} parent=1 // pred_check_branch
      %1191 = sbr.rel (0) target = $region37
    $region36: #{tpu_custom_call.1} parent=1 // pred_region
      %1192 = dma.done [#allocation4], 16
    $region37: #{tpu_custom_call.1} parent=1 // pred_fallthru
      _
    %1193 = vsyncpa [#allocation3], 1
    %1194 = vsyncpa [#allocation6], 1
    %1195 = vsyncpa [#allocation4], 1

</llo_original>
